<compile_context>
chip_gen: v7x
topology: tpu7x:2x2x1
jax: 0.10.0
libtpu: 0.0.40
codegen_flags: <defaults>
</compile_context>

<pallas_src>
import functools

import jax
import jax.numpy as jnp
from jax.experimental import pallas as pl
from jax.experimental.pallas import tpu as pltpu

# ---- packed-parameter slab layout (all row offsets are 8-aligned) ------------
LANE = 128          # padded feature width for input / hidden / output
BIAS_ROWS = 8       # each bias gets an aligned 8-row block (row 0 holds data)

W1_OFF = 0                          # rows [  0, 128)
B1_OFF = W1_OFF + LANE              # rows [128, 136)
W2_OFF = B1_OFF + BIAS_ROWS         # rows [136, 264)
B2_OFF = W2_OFF + LANE              # rows [264, 272)
W3_OFF = B2_OFF + BIAS_ROWS         # rows [272, 400)
B3_OFF = W3_OFF + LANE              # rows [400, 408)
TOTAL_ROWS = B3_OFF + BIAS_ROWS     # 408


def _round_up(x, m):
    return ((x + m - 1) // m) * m


def mlp_kernel(x_ref, p_ref, o_ref):
    """Fused 3-layer MLP on one batch tile. p_ref is the packed parameter slab."""
    x = x_ref[...]                                         # [TILE_B, 128] f32

    w1 = p_ref[W1_OFF:W1_OFF + LANE, :]                    # [128, 128]
    b1 = p_ref[B1_OFF:B1_OFF + BIAS_ROWS, :][0:1, :]       # [1, 128]
    w2 = p_ref[W2_OFF:W2_OFF + LANE, :]
    b2 = p_ref[B2_OFF:B2_OFF + BIAS_ROWS, :][0:1, :]
    w3 = p_ref[W3_OFF:W3_OFF + LANE, :]
    b3 = p_ref[B3_OFF:B3_OFF + BIAS_ROWS, :][0:1, :]

    h1 = jnp.maximum(
        jnp.dot(x, w1, preferred_element_type=jnp.float32) + b1, 0.0)
    h2 = jnp.maximum(
        jnp.dot(h1, w2, preferred_element_type=jnp.float32) + b2, 0.0)
    out = jnp.dot(h2, w3, preferred_element_type=jnp.float32) + b3
    o_ref[...] = out.astype(o_ref.dtype)


def pack_params(params, input_size, hidden_size, output_size):
    """Zero-pad and pack all layer params into a single [408, 128] f32 slab.

    Zero padding is exact: padded lanes stay identically zero through matmul
    and relu, so the valid output columns are unaffected.
    """
    assert input_size <= LANE and hidden_size <= LANE and output_size <= LANE
    slab = jnp.zeros((TOTAL_ROWS, LANE), jnp.float32)
    slab = slab.at[W1_OFF:W1_OFF + input_size, :hidden_size].set(params["w1"])
    slab = slab.at[B1_OFF, :hidden_size].set(params["b1"].reshape(-1))
    slab = slab.at[W2_OFF:W2_OFF + hidden_size, :hidden_size].set(params["w2"])
    slab = slab.at[B2_OFF, :hidden_size].set(params["b2"].reshape(-1))
    slab = slab.at[W3_OFF:W3_OFF + hidden_size, :output_size].set(params["w3"])
    slab = slab.at[B3_OFF, :output_size].set(params["b3"].reshape(-1))
    return slab


@functools.partial(jax.jit, static_argnames=("output_size", "tile_b"))
def neural_network_forward(x, packed_params, *, output_size, tile_b=256):
    """Forward pass mirroring NeuralNetwork.forward.

    x:             [B, input_size] float32
    packed_params: [408, 128] float32 slab from pack_params().
    Returns        [B, output_size] float32.
    """
    B, in_size = x.shape
    # Batch tile: big for rollout-sized batches, shrink to one step for tiny ones.
    tile_b = min(tile_b, _round_up(B, 8))
    b_pad = _round_up(B, tile_b)

    # Lane-dense, zero-padded input slab [b_pad, 128].
    x_pad = jnp.zeros((b_pad, LANE), jnp.float32).at[:B, :in_size].set(x)

    grid = (b_pad // tile_b,)
    flops = 2 * b_pad * (LANE * LANE * 3)
    bytes_accessed = (x_pad.size + packed_params.size + b_pad * LANE) * 4

    out_pad = pl.pallas_call(
        mlp_kernel,
        out_shape=jax.ShapeDtypeStruct((b_pad, LANE), jnp.float32),
        grid_spec=pltpu.PrefetchScalarGridSpec(
            num_scalar_prefetch=0,
            grid=grid,
            in_specs=[
                # Batch tile of the input.
                pl.BlockSpec((tile_b, LANE), lambda i: (i, 0)),
                # Whole parameter slab; constant index_map -> VMEM-resident.
                pl.BlockSpec((TOTAL_ROWS, LANE), lambda i: (0, 0)),
            ],
            out_specs=pl.BlockSpec((tile_b, LANE), lambda i: (i, 0)),
        ),
        compiler_params=pltpu.CompilerParams(
            dimension_semantics=("parallel",),   # use both TCs on v7x
        ),
        cost_estimate=pl.CostEstimate(
            flops=flops, transcendentals=0, bytes_accessed=bytes_accessed),
    )(x_pad, packed_params)

    # Slice off batch/lane padding (kernel output itself is lane-dense).
    return out_pad[:B, :output_size]


def init_params(key, input_size, hidden_size, output_size):
    """Deterministic init matching nn.Linear shapes (weights stored transposed)."""
    ks = jax.random.split(key, 6)

    def linear(kw, kb, fan_in, fan_out):
        bound = 1.0 / jnp.sqrt(fan_in)
        w = jax.random.uniform(kw, (fan_in, fan_out), jnp.float32, -bound, bound)
        b = jax.random.uniform(kb, (1, fan_out), jnp.float32, -bound, bound)
        return w, b

    w1, b1 = linear(ks[0], ks[1], input_size, hidden_size)
    w2, b2 = linear(ks[2], ks[3], hidden_size, hidden_size)
    w3, b3 = linear(ks[4], ks[5], hidden_size, output_size)
    return {"w1": w1, "b1": b1, "w2": w2, "b2": b2, "w3": w3, "b3": b3}


def _reference(x, params):
    h1 = jnp.maximum(x @ params["w1"] + params["b1"], 0.0)
    h2 = jnp.maximum(h1 @ params["w2"] + params["b2"], 0.0)
    return h2 @ params["w3"] + params["b3"]


if __name__ == "__main__":
    # RL Q-network-like shapes: state dim 16, hidden 32, 4 actions.
    input_size, hidden_size, output_size = 16, 32, 4

    key = jax.random.PRNGKey(0)
    k_x, k_x2, k_p = jax.random.split(key, 3)
    params = init_params(k_p, input_size, hidden_size, output_size)

    # Pack once (amortized across all forward calls in a real rollout loop).
    packed = pack_params(params, input_size, hidden_size, output_size)

    # --- small batch (single grid step) ---------------------------------------
    batch = 8
    x = jax.random.normal(k_x, (batch, input_size), jnp.float32)
    out = jax.block_until_ready(
        neural_network_forward(x, packed, output_size=output_size))
    ref = _reference(x, params)
    assert out.shape == (batch, output_size)
    assert jnp.allclose(out, ref, atol=1e-5, rtol=1e-5)

    # --- ragged batch (multi-step grid + batch padding path) ------------------
    batch2 = 300
    x2 = jax.random.normal(k_x2, (batch2, input_size), jnp.float32)
    out2 = jax.block_until_ready(
        neural_network_forward(x2, packed, output_size=output_size))
    ref2 = _reference(x2, params)
    assert out2.shape == (batch2, output_size)
    assert jnp.allclose(out2, ref2, atol=1e-5, rtol=1e-5)

    print("KERNEL_OK")
</pallas_src>

<mosaic_0001>
module attributes {stable_mosaic.version = 11 : i64} {
  func.func @mlp_kernel(%arg0: i32, %arg1: memref<8x128xf32, #tpu.memory_space<vmem>>, %arg2: memref<408x128xf32, #tpu.memory_space<vmem>>, %arg3: memref<8x128xf32, #tpu.memory_space<vmem>>) attributes {dimension_semantics = [#tpu.dimension_semantics<parallel>], iteration_bounds = array<i64: 1>, scalar_prefetch = 0 : i64, scratch_operands = 0 : i64, tpu.core_type = #tpu.core_type<tc>, window_params = [{transform_indices = @transform_0, window_bounds = array<i64: 8, 128>}, {pipeline_mode = #tpu.pipeline_mode<synchronous>, transform_indices = @transform_1, window_bounds = array<i64: 408, 128>}, {transform_indices = @transform_2, window_bounds = array<i64: 8, 128>}]} {
    %c0 = arith.constant 0 : index
    %c0_0 = arith.constant 0 : index
    %0 = vector.load %arg1[%c0, %c0_0] : memref<8x128xf32, #tpu.memory_space<vmem>>, vector<8x128xf32>
    %c0_1 = arith.constant 0 : index
    %c0_2 = arith.constant 0 : index
    %1 = vector.load %arg2[%c0_1, %c0_2] : memref<408x128xf32, #tpu.memory_space<vmem>>, vector<128x128xf32>
    %c128 = arith.constant 128 : index
    %c0_3 = arith.constant 0 : index
    %2 = vector.load %arg2[%c128, %c0_3] : memref<408x128xf32, #tpu.memory_space<vmem>>, vector<8x128xf32>
    %3 = vector.extract_strided_slice %2 {offsets = [0, 0], sizes = [1, 128], strides = [1, 1]} : vector<8x128xf32> to vector<1x128xf32>
    %c136 = arith.constant 136 : index
    %c0_4 = arith.constant 0 : index
    %4 = vector.load %arg2[%c136, %c0_4] : memref<408x128xf32, #tpu.memory_space<vmem>>, vector<128x128xf32>
    %c264 = arith.constant 264 : index
    %c0_5 = arith.constant 0 : index
    %5 = vector.load %arg2[%c264, %c0_5] : memref<408x128xf32, #tpu.memory_space<vmem>>, vector<8x128xf32>
    %6 = vector.extract_strided_slice %5 {offsets = [0, 0], sizes = [1, 128], strides = [1, 1]} : vector<8x128xf32> to vector<1x128xf32>
    %c272 = arith.constant 272 : index
    %c0_6 = arith.constant 0 : index
    %7 = vector.load %arg2[%c272, %c0_6] : memref<408x128xf32, #tpu.memory_space<vmem>>, vector<128x128xf32>
    %c400 = arith.constant 400 : index
    %c0_7 = arith.constant 0 : index
    %8 = vector.load %arg2[%c400, %c0_7] : memref<408x128xf32, #tpu.memory_space<vmem>>, vector<8x128xf32>
    %9 = vector.extract_strided_slice %8 {offsets = [0, 0], sizes = [1, 128], strides = [1, 1]} : vector<8x128xf32> to vector<1x128xf32>
    %cst = arith.constant dense<0.000000e+00> : vector<8x128xf32>
    %10 = tpu.matmul %0, %1, %cst {dimension_numbers = #tpu.dot_dimension_numbers<[1], [0], [0], [1], [0, 0, 1, 1], [], []>} : vector<8x128xf32>, vector<128x128xf32>, vector<8x128xf32> -> vector<8x128xf32>
    %11 = vector.broadcast %3 : vector<1x128xf32> to vector<8x128xf32>
    %12 = arith.addf %10, %11 : vector<8x128xf32>
    %cst_8 = arith.constant 0.000000e+00 : f32
    %13 = vector.broadcast %cst_8 : f32 to vector<8x128xf32>
    %14 = arith.maximumf %12, %13 : vector<8x128xf32>
    %cst_9 = arith.constant dense<0.000000e+00> : vector<8x128xf32>
    %15 = tpu.matmul %14, %4, %cst_9 {dimension_numbers = #tpu.dot_dimension_numbers<[1], [0], [0], [1], [0, 0, 1, 1], [], []>} : vector<8x128xf32>, vector<128x128xf32>, vector<8x128xf32> -> vector<8x128xf32>
    %16 = vector.broadcast %6 : vector<1x128xf32> to vector<8x128xf32>
    %17 = arith.addf %15, %16 : vector<8x128xf32>
    %cst_10 = arith.constant 0.000000e+00 : f32
    %18 = vector.broadcast %cst_10 : f32 to vector<8x128xf32>
    %19 = arith.maximumf %17, %18 : vector<8x128xf32>
    %cst_11 = arith.constant dense<0.000000e+00> : vector<8x128xf32>
    %20 = tpu.matmul %19, %7, %cst_11 {dimension_numbers = #tpu.dot_dimension_numbers<[1], [0], [0], [1], [0, 0, 1, 1], [], []>} : vector<8x128xf32>, vector<128x128xf32>, vector<8x128xf32> -> vector<8x128xf32>
    %21 = vector.broadcast %9 : vector<1x128xf32> to vector<8x128xf32>
    %22 = arith.addf %20, %21 : vector<8x128xf32>
    %c0_12 = arith.constant 0 : index
    %c0_13 = arith.constant 0 : index
    %23 = vector.load %arg3[%c0_12, %c0_13] : memref<8x128xf32, #tpu.memory_space<vmem>>, vector<8x128xf32>
    tpu.vector_store %arg3[%c0_12, %c0_13], %22 {strides = array<i32>} : memref<8x128xf32, #tpu.memory_space<vmem>>, vector<8x128xf32>,
    return
  }
  func.func @transform_0(%arg0: i32) -> (i32, i32) {
    %c0_i32 = arith.constant 0 : i32
    %c0_i32_0 = arith.constant 0 : i32
    return %arg0, %c0_i32 : i32, i32
  }
  func.func @transform_1(%arg0: i32) -> (i32, i32) {
    %c0_i32 = arith.constant 0 : i32
    %c0_i32_0 = arith.constant 0 : i32
    %c0_i32_1 = arith.constant 0 : i32
    return %c0_i32, %c0_i32_0 : i32, i32
  }
  func.func @transform_2(%arg0: i32) -> (i32, i32) {
    %c0_i32 = arith.constant 0 : i32
    %c0_i32_0 = arith.constant 0 : i32
    return %arg0, %c0_i32 : i32, i32
  }
}

</mosaic_0001>

<llo_original>
// kernel: neural_network_forward.1
$region0: #{neural_network_forward.1}
  #allocation0 [shape = 'u32[]', space=smem, size = 0x4, offset = 0x4, fixed_abs, tag = 'smem constant byte address 0x4 - core index']
  #allocation1 [shape = 'u32[144,128]{1,0:T(1,128)}', space=vmem, size = 0x12000, scoped, tag = 'internal scratch']
  %s0 = inlined_call_operand.vmem [shape: f32[8,128], index: 0, kind: input, shape index: {}]
  %s1 = inlined_call_operand.hbm [shape: f32[408,128], index: 1, kind: input, shape index: {}]
  %s2 = inlined_call_operand.vmem [shape: f32[8,128], index: 2, kind: output, shape index: {}]
  %s3 = sld [smem:[#allocation0]]
  $region22: #{neural_network_forward.1} parent=0
    _
  %s5 = ssub.s32 1, %s3
  %s6 = scalar_select 0, %s5, %s3
  $region1: #{neural_network_forward.1} parent=0
    #allocation2 [shape = 'u8[208896]{0}', space=vmem, size = 0x33000, scoped, tag = 'input window, operand 1, single buffered']
    #allocation3 [shape = 's32[1]{0}', space=sflag, size = 0x4, scoped, tag = 'scoped memory for neural_network_forward.1']
    %7 = vsyncpa [#allocation3], 0
    // Predicated region
    $region2: #{neural_network_forward.1} parent=1 // pred_check
      _
    $region3: #{neural_network_forward.1} parent=1 // pred_check_branch
      %9 = sbr.rel (0) target = $region5
    $region4: #{neural_network_forward.1} parent=1 // pred_region
      _
    $region5: #{neural_network_forward.1} parent=1 // pred_fallthru
      _
    // Predicated region
    $region6: #{neural_network_forward.1} parent=1 // pred_check
      _
    $region7: #{neural_network_forward.1} parent=1 // pred_check_branch
      %11 = sbr.rel (0) target = $region9
    $region8: #{neural_network_forward.1} parent=1 // pred_region
      %s13 = ssub.s32 6528, 6528
      %14 = vsyncadd [#allocation3], %s13
      %s15 = sshll.u32 [#allocation2], 4
      %s16 = int_to_ptr.vmem [resolvable:$true] %s15
      %21 = dma.hbm_to_vmem [thread:$0]  %s1, 6528, %s16, [#allocation3], 128, 128, 8
    $region9: #{neural_network_forward.1} parent=1 // pred_fallthru
      _
    // Predicated region
    $region10: #{neural_network_forward.1} parent=1 // pred_check
      _
    $region11: #{neural_network_forward.1} parent=1 // pred_check_branch
      %23 = sbr.rel (0) target = $region13
    $region12: #{neural_network_forward.1} parent=1 // pred_region
      %24 = dma.done [#allocation3], 6528
    $region13: #{neural_network_forward.1} parent=1 // pred_fallthru
      _
    %v25 = vld [vmem:[%s0] sm:$0xff]
    %v26 = vld [vmem:[#allocation2] sm:$0xff]
    %v27 = vld [vmem:[#allocation2 + $0x8] sm:$0xff]
    %v28 = vld [vmem:[#allocation2 + $0x10] sm:$0xff]
    %v29 = vld [vmem:[#allocation2 + $0x18] sm:$0xff]
    %v30 = vld [vmem:[#allocation2 + $0x20] sm:$0xff]
    %v31 = vld [vmem:[#allocation2 + $0x28] sm:$0xff]
    %v32 = vld [vmem:[#allocation2 + $0x30] sm:$0xff]
    %v33 = vld [vmem:[#allocation2 + $0x38] sm:$0xff]
    %v34 = vld [vmem:[#allocation2 + $0x40] sm:$0xff]
    %v35 = vld [vmem:[#allocation2 + $0x48] sm:$0xff]
    %v36 = vld [vmem:[#allocation2 + $0x50] sm:$0xff]
    %v37 = vld [vmem:[#allocation2 + $0x58] sm:$0xff]
    %v38 = vld [vmem:[#allocation2 + $0x60] sm:$0xff]
    %v39 = vld [vmem:[#allocation2 + $0x68] sm:$0xff]
    %v40 = vld [vmem:[#allocation2 + $0x70] sm:$0xff]
    %v41 = vld [vmem:[#allocation2 + $0x78] sm:$0xff]
    %v42 = vld [vmem:[#allocation2 + $0x80] sm:$0xff]
    %v43 = vld [vmem:[#allocation2 + $0x88] sm:$0xff]
    %v44 = vld [vmem:[#allocation2 + $0x90] sm:$0xff]
    %v45 = vld [vmem:[#allocation2 + $0x98] sm:$0xff]
    %v46 = vld [vmem:[#allocation2 + $0xa0] sm:$0xff]
    %v47 = vld [vmem:[#allocation2 + $0xa8] sm:$0xff]
    %v48 = vld [vmem:[#allocation2 + $0xb0] sm:$0xff]
    %v49 = vld [vmem:[#allocation2 + $0xb8] sm:$0xff]
    %v50 = vld [vmem:[#allocation2 + $0xc0] sm:$0xff]
    %v51 = vld [vmem:[#allocation2 + $0xc8] sm:$0xff]
    %v52 = vld [vmem:[#allocation2 + $0xd0] sm:$0xff]
    %v53 = vld [vmem:[#allocation2 + $0xd8] sm:$0xff]
    %v54 = vld [vmem:[#allocation2 + $0xe0] sm:$0xff]
    %v55 = vld [vmem:[#allocation2 + $0xe8] sm:$0xff]
    %v56 = vld [vmem:[#allocation2 + $0xf0] sm:$0xff]
    %v57 = vld [vmem:[#allocation2 + $0xf8] sm:$0xff]
    %v58 = vld [vmem:[#allocation2 + $0x100] sm:$0xff]
    %v59 = vld [vmem:[#allocation2 + $0x108] sm:$0xff]
    %v60 = vld [vmem:[#allocation2 + $0x110] sm:$0xff]
    %v61 = vld [vmem:[#allocation2 + $0x118] sm:$0xff]
    %v62 = vld [vmem:[#allocation2 + $0x120] sm:$0xff]
    %v63 = vld [vmem:[#allocation2 + $0x128] sm:$0xff]
    %v64 = vld [vmem:[#allocation2 + $0x130] sm:$0xff]
    %v65 = vld [vmem:[#allocation2 + $0x138] sm:$0xff]
    %v66 = vld [vmem:[#allocation2 + $0x140] sm:$0xff]
    %v67 = vld [vmem:[#allocation2 + $0x148] sm:$0xff]
    %v68 = vld [vmem:[#allocation2 + $0x150] sm:$0xff]
    %v69 = vld [vmem:[#allocation2 + $0x158] sm:$0xff]
    %v70 = vld [vmem:[#allocation2 + $0x160] sm:$0xff]
    %v71 = vld [vmem:[#allocation2 + $0x168] sm:$0xff]
    %v72 = vld [vmem:[#allocation2 + $0x170] sm:$0xff]
    %v73 = vld [vmem:[#allocation2 + $0x178] sm:$0xff]
    %v74 = vld [vmem:[#allocation2 + $0x180] sm:$0xff]
    %v75 = vld [vmem:[#allocation2 + $0x188] sm:$0xff]
    %v76 = vld [vmem:[#allocation2 + $0x190] sm:$0xff]
    %v77 = vlaneseq
    %v78 = vshrl.u32 %v77, 7
    %v79 = vsub.s32 0, %v78
    %v80 = vrot.slane %v42, %v79
    %81 = vmatprep.subr.mxu0 0.0
    %82 = vmatpush1.msra.mxu0 %v26
    %83 = vmatprep.subr.mxu0 0.0
    %84 = vmatpush1.msra.mxu0 %v27
    %85 = vmatprep.subr.mxu0 0.0
    %86 = vmatpush1.msra.mxu0 %v28
    %87 = vmatprep.subr.mxu0 0.0
    %88 = vmatpush1.msra.mxu0 %v29
    %89 = vmatprep.subr.mxu0 0.0
    %90 = vmatpush1.msra.mxu0 %v30
    %91 = vmatprep.subr.mxu0 0.0
    %92 = vmatpush1.msra.mxu0 %v31
    %93 = vmatprep.subr.mxu0 0.0
    %94 = vmatpush1.msra.mxu0 %v32
    %95 = vmatprep.subr.mxu0 0.0
    %96 = vmatpush1.msra.mxu0 %v33
    %97 = vmatprep.subr.mxu0 0.0
    %98 = vmatpush1.msra.mxu0 %v34
    %99 = vmatprep.subr.mxu0 0.0
    %100 = vmatpush1.msra.mxu0 %v35
    %101 = vmatprep.subr.mxu0 0.0
    %102 = vmatpush1.msra.mxu0 %v36
    %103 = vmatprep.subr.mxu0 0.0
    %104 = vmatpush1.msra.mxu0 %v37
    %105 = vmatprep.subr.mxu0 0.0
    %106 = vmatpush1.msra.mxu0 %v38
    %107 = vmatprep.subr.mxu0 0.0
    %108 = vmatpush1.msra.mxu0 %v39
    %109 = vmatprep.subr.mxu0 0.0
    %110 = vmatpush1.msra.mxu0 %v40
    %111 = vmatprep.subr.mxu0 0.0
    %112 = vmatpush1.msra.mxu0 %v41
    %113 = vmatprep.subr.mxu0 0.0
    %114 = vmatpush1.msra.mxu0 0.0
    %115 = vmatprep.subr.mxu0 0.0
    %116 = vmatpush1.msra.mxu0 0.0
    %117 = vmatprep.subr.mxu0 0.0
    %118 = vmatpush1.msra.mxu0 0.0
    %119 = vmatprep.subr.mxu0 0.0
    %120 = vmatpush1.msra.mxu0 0.0
    %121 = vmatprep.subr.mxu0 0.0
    %122 = vmatpush1.msra.mxu0 0.0
    %123 = vmatprep.subr.mxu0 0.0
    %124 = vmatpush1.msra.mxu0 0.0
    %125 = vmatprep.subr.mxu0 0.0
    %126 = vmatpush1.msra.mxu0 0.0
    %127 = vmatprep.subr.mxu0 0.0
    %128 = vmatpush1.msra.mxu0 0.0
    %129 = vmatprep.subr.mxu0 0.0
    %130 = vmatpush1.msra.mxu0 0.0
    %131 = vmatprep.subr.mxu0 0.0
    %132 = vmatpush1.msra.mxu0 0.0
    %133 = vmatprep.subr.mxu0 0.0
    %134 = vmatpush1.msra.mxu0 0.0
    %135 = vmatprep.subr.mxu0 0.0
    %136 = vmatpush1.msra.mxu0 0.0
    %137 = vmatprep.subr.mxu0 0.0
    %138 = vmatpush1.msra.mxu0 0.0
    %139 = vmatprep.subr.mxu0 0.0
    %140 = vmatpush1.msra.mxu0 0.0
    %141 = vmatprep.subr.mxu0 0.0
    %142 = vmatpush1.msra.mxu0 0.0
    %143 = vmatprep.subr.mxu0 0.0
    %144 = vmatpush1.msra.mxu0 0.0
    %145 = vmatprep.mubr.f32.mxu0 0.0
    %146 = vmatmul.mubr.f32.gmra.mrb[0].mxu0 %v25
    %v147 = vpop.f32.mrb[0].mxu0
    %v148 = vadd.f32 %v80, %v147
    %v149 = vpop.f32.mrb[0].mxu0
    %150 = vdwg.mxu0
    %v151 = vmax.f32 %v148, 0.0
    %v152 = vlaneseq
    %v153 = vshrl.u32 %v152, 7
    %v154 = vsub.s32 0, %v153
    %v155 = vrot.slane %v59, %v154
    %156 = vmatprep.subr.mxu0 0.0
    %157 = vmatpush1.msra.mxu0 %v43
    %158 = vmatprep.subr.mxu0 0.0
    %159 = vmatpush1.msra.mxu0 %v44
    %160 = vmatprep.subr.mxu0 0.0
    %161 = vmatpush1.msra.mxu0 %v45
    %162 = vmatprep.subr.mxu0 0.0
    %163 = vmatpush1.msra.mxu0 %v46
    %164 = vmatprep.subr.mxu0 0.0
    %165 = vmatpush1.msra.mxu0 %v47
    %166 = vmatprep.subr.mxu0 0.0
    %167 = vmatpush1.msra.mxu0 %v48
    %168 = vmatprep.subr.mxu0 0.0
    %169 = vmatpush1.msra.mxu0 %v49
    %170 = vmatprep.subr.mxu0 0.0
    %171 = vmatpush1.msra.mxu0 %v50
    %172 = vmatprep.subr.mxu0 0.0
    %173 = vmatpush1.msra.mxu0 %v51
    %174 = vmatprep.subr.mxu0 0.0
    %175 = vmatpush1.msra.mxu0 %v52
    %176 = vmatprep.subr.mxu0 0.0
    %177 = vmatpush1.msra.mxu0 %v53
    %178 = vmatprep.subr.mxu0 0.0
    %179 = vmatpush1.msra.mxu0 %v54
    %180 = vmatprep.subr.mxu0 0.0
    %181 = vmatpush1.msra.mxu0 %v55
    %182 = vmatprep.subr.mxu0 0.0
    %183 = vmatpush1.msra.mxu0 %v56
    %184 = vmatprep.subr.mxu0 0.0
    %185 = vmatpush1.msra.mxu0 %v57
    %186 = vmatprep.subr.mxu0 0.0
    %187 = vmatpush1.msra.mxu0 %v58
    %188 = vmatprep.subr.mxu0 0.0
    %189 = vmatpush1.msra.mxu0 0.0
    %190 = vmatprep.subr.mxu0 0.0
    %191 = vmatpush1.msra.mxu0 0.0
    %192 = vmatprep.subr.mxu0 0.0
    %193 = vmatpush1.msra.mxu0 0.0
    %194 = vmatprep.subr.mxu0 0.0
    %195 = vmatpush1.msra.mxu0 0.0
    %196 = vmatprep.subr.mxu0 0.0
    %197 = vmatpush1.msra.mxu0 0.0
    %198 = vmatprep.subr.mxu0 0.0
    %199 = vmatpush1.msra.mxu0 0.0
    %200 = vmatprep.subr.mxu0 0.0
    %201 = vmatpush1.msra.mxu0 0.0
    %202 = vmatprep.subr.mxu0 0.0
    %203 = vmatpush1.msra.mxu0 0.0
    %204 = vmatprep.subr.mxu0 0.0
    %205 = vmatpush1.msra.mxu0 0.0
    %206 = vmatprep.subr.mxu0 0.0
    %207 = vmatpush1.msra.mxu0 0.0
    %208 = vmatprep.subr.mxu0 0.0
    %209 = vmatpush1.msra.mxu0 0.0
    %210 = vmatprep.subr.mxu0 0.0
    %211 = vmatpush1.msra.mxu0 0.0
    %212 = vmatprep.subr.mxu0 0.0
    %213 = vmatpush1.msra.mxu0 0.0
    %214 = vmatprep.subr.mxu0 0.0
    %215 = vmatpush1.msra.mxu0 0.0
    %216 = vmatprep.subr.mxu0 0.0
    %217 = vmatpush1.msra.mxu0 0.0
    %218 = vmatprep.subr.mxu0 0.0
    %219 = vmatpush1.msra.mxu0 0.0
    %220 = vmatprep.mubr.f32.mxu0 0.0
    %221 = vmatmul.mubr.f32.gmra.mrb[0].mxu0 %v151
    %v222 = vpop.f32.mrb[0].mxu0
    %v223 = vadd.f32 %v155, %v222
    %v224 = vpop.f32.mrb[0].mxu0
    %225 = vdwg.mxu0
    %v226 = vmax.f32 %v223, 0.0
    %v227 = vlaneseq
    %v228 = vshrl.u32 %v227, 7
    %v229 = vsub.s32 0, %v228
    %v230 = vrot.slane %v76, %v229
    %231 = vmatprep.subr.mxu0 0.0
    %232 = vmatpush1.msra.mxu0 %v60
    %233 = vmatprep.subr.mxu0 0.0
    %234 = vmatpush1.msra.mxu0 %v61
    %235 = vmatprep.subr.mxu0 0.0
    %236 = vmatpush1.msra.mxu0 %v62
    %237 = vmatprep.subr.mxu0 0.0
    %238 = vmatpush1.msra.mxu0 %v63
    %239 = vmatprep.subr.mxu0 0.0
    %240 = vmatpush1.msra.mxu0 %v64
    %241 = vmatprep.subr.mxu0 0.0
    %242 = vmatpush1.msra.mxu0 %v65
    %243 = vmatprep.subr.mxu0 0.0
    %244 = vmatpush1.msra.mxu0 %v66
    %245 = vmatprep.subr.mxu0 0.0
    %246 = vmatpush1.msra.mxu0 %v67
    %247 = vmatprep.subr.mxu0 0.0
    %248 = vmatpush1.msra.mxu0 %v68
    %249 = vmatprep.subr.mxu0 0.0
    %250 = vmatpush1.msra.mxu0 %v69
    %251 = vmatprep.subr.mxu0 0.0
    %252 = vmatpush1.msra.mxu0 %v70
    %253 = vmatprep.subr.mxu0 0.0
    %254 = vmatpush1.msra.mxu0 %v71
    %255 = vmatprep.subr.mxu0 0.0
    %256 = vmatpush1.msra.mxu0 %v72
    %257 = vmatprep.subr.mxu0 0.0
    %258 = vmatpush1.msra.mxu0 %v73
    %259 = vmatprep.subr.mxu0 0.0
    %260 = vmatpush1.msra.mxu0 %v74
    %261 = vmatprep.subr.mxu0 0.0
    %262 = vmatpush1.msra.mxu0 %v75
    %263 = vmatprep.subr.mxu0 0.0
    %264 = vmatpush1.msra.mxu0 0.0
    %265 = vmatprep.subr.mxu0 0.0
    %266 = vmatpush1.msra.mxu0 0.0
    %267 = vmatprep.subr.mxu0 0.0
    %268 = vmatpush1.msra.mxu0 0.0
    %269 = vmatprep.subr.mxu0 0.0
    %270 = vmatpush1.msra.mxu0 0.0
    %271 = vmatprep.subr.mxu0 0.0
    %272 = vmatpush1.msra.mxu0 0.0
    %273 = vmatprep.subr.mxu0 0.0
    %274 = vmatpush1.msra.mxu0 0.0
    %275 = vmatprep.subr.mxu0 0.0
    %276 = vmatpush1.msra.mxu0 0.0
    %277 = vmatprep.subr.mxu0 0.0
    %278 = vmatpush1.msra.mxu0 0.0
    %279 = vmatprep.subr.mxu0 0.0
    %280 = vmatpush1.msra.mxu0 0.0
    %281 = vmatprep.subr.mxu0 0.0
    %282 = vmatpush1.msra.mxu0 0.0
    %283 = vmatprep.subr.mxu0 0.0
    %284 = vmatpush1.msra.mxu0 0.0
    %285 = vmatprep.subr.mxu0 0.0
    %286 = vmatpush1.msra.mxu0 0.0
    %287 = vmatprep.subr.mxu0 0.0
    %288 = vmatpush1.msra.mxu0 0.0
    %289 = vmatprep.subr.mxu0 0.0
    %290 = vmatpush1.msra.mxu0 0.0
    %291 = vmatprep.subr.mxu0 0.0
    %292 = vmatpush1.msra.mxu0 0.0
    %293 = vmatprep.subr.mxu0 0.0
    %294 = vmatpush1.msra.mxu0 0.0
    %295 = vmatprep.mubr.f32.mxu0 0.0
    %296 = vmatmul.mubr.f32.gmra.mrb[0].mxu0 %v226
    %v297 = vpop.f32.mrb[0].mxu0
    %v298 = vadd.f32 %v230, %v297
    %v299 = vpop.f32.mrb[0].mxu0
    %300 = vdwg.mxu0
    %301 = vst [vmem:[%s2] sm:$0xff] %v298
    // Predicated region
    $region14: #{neural_network_forward.1} parent=1 // pred_check
      _
    $region15: #{neural_network_forward.1} parent=1 // pred_check_branch
      %303 = sbr.rel (0) target = $region17
    $region16: #{neural_network_forward.1} parent=1 // pred_region
      _
    $region17: #{neural_network_forward.1} parent=1 // pred_fallthru
      _
    // Predicated region
    $region18: #{neural_network_forward.1} parent=1 // pred_check
      _
    $region19: #{neural_network_forward.1} parent=1 // pred_check_branch
      %305 = sbr.rel (0) target = $region21
    $region20: #{neural_network_forward.1} parent=1 // pred_region
      _
    $region21: #{neural_network_forward.1} parent=1 // pred_fallthru
      _
    %306 = vsyncpa [#allocation3], 1

</llo_original>
